<compile_context>
chip_gen: v5e
topology: v5e:2x2
jax: 0.10.0
libtpu: 0.0.40
codegen_flags: <defaults>
</compile_context>

<pallas_src>
import functools

import jax
import jax.numpy as jnp
from jax.experimental import pallas as pl
from jax.experimental.pallas import tpu as pltpu

BIASOFFSET = -3.3
LN_EPS = 1e-5


def _round_up(a, b):
    return ((a + b - 1) // b) * b


def _gated_adapter_kernel(x_ref, w1_ref, b1_ref, w23_ref, b23_ref,
                          g_ref, beta_ref, o_ref):
    # One tile of rows: x_ref is (tm, D); weights are fully resident in VMEM.
    x = x_ref[...].astype(jnp.float32)
    D = x.shape[-1]

    # fc1 + relu  (bf16 MXU matmul, f32 accumulate; bias/relu in f32)
    h = jnp.dot(x.astype(jnp.bfloat16), w1_ref[...],
                preferred_element_type=jnp.float32) + b1_ref[...]
    h = jnp.maximum(h, 0.0)

    # Fused fc2|fc3: one (tm, H) x (H, 2D) contraction. BIASOFFSET is already
    # folded into the gate half of b23.
    fused = jnp.dot(h.astype(jnp.bfloat16), w23_ref[...],
                    preferred_element_type=jnp.float32) + b23_ref[...]
    x2 = fused[:, :D]
    z = jax.nn.sigmoid(fused[:, D:])

    # Gated residual mix (f32).
    y = x2 * z + x * (1.0 - z)

    # LayerNorm over last dim (biased variance, like torch.nn.LayerNorm).
    mean = jnp.mean(y, axis=-1, keepdims=True)
    cen = y - mean
    var = jnp.mean(cen * cen, axis=-1, keepdims=True)
    yn = cen * jax.lax.rsqrt(var + LN_EPS)
    o_ref[...] = (yn * g_ref[...] + beta_ref[...]).astype(o_ref.dtype)


@functools.partial(jax.jit, static_argnames=("tm", "single_buffer_weights"))
def _forward(x, packed, *, tm, single_buffer_weights):
    B, S, D = x.shape
    H = packed["w1"].shape[1]
    N = B * S

    # Row tile: multiple of 8 (f32 sublanes), capped so the grid keeps at
    # least 2 steps (feeds both TensorCores on v7x) and never exceeds N.
    tm_eff = min(int(tm), _round_up(max(N // 2, 8), 8))
    tm_eff = max(tm_eff, 8)
    N_pad = _round_up(N, tm_eff)

    x2d = x.reshape(N, D)
    if N_pad != N:
        # Zero-padded rows pass harmlessly through matmul + LayerNorm and are
        # sliced off afterwards (removes the old N % tm == 0 restriction).
        x2d = jnp.pad(x2d, ((0, N_pad - N), (0, 0)))

    if single_buffer_weights:
        def wspec(shape):
            return pl.BlockSpec(shape, lambda i: (0, 0),
                                pipeline_mode=pl.Buffered(1))
    else:
        def wspec(shape):
            return pl.BlockSpec(shape, lambda i: (0, 0))

    # Explicit scoped-VMEM budget: bf16 weights (single copy) + double-buffered
    # f32 x/out tiles + intermediate h / fused / y slabs, with 2x headroom.
    weight_bytes = (D * H + H * 2 * D) * 2 + (H + 5 * D) * 4
    tile_bytes = 2 * 2 * tm_eff * D * 4
    interm_bytes = 2 * tm_eff * (H + 2 * D) * 4
    vmem_limit = min(48 << 20,
                     max(32 << 20, 2 * (weight_bytes + tile_bytes + interm_bytes)))

    out2d = pl.pallas_call(
        _gated_adapter_kernel,
        out_shape=jax.ShapeDtypeStruct((N_pad, D), x.dtype),
        grid_spec=pltpu.PrefetchScalarGridSpec(
            num_scalar_prefetch=0,
            grid=(N_pad // tm_eff,),
            in_specs=[
                pl.BlockSpec((tm_eff, D), lambda i: (i, 0)),  # x tile
                wspec((D, H)),        # w1 (bf16)
                wspec((1, H)),        # b1
                wspec((H, 2 * D)),    # fused w2|w3 (bf16)
                wspec((1, 2 * D)),    # fused b2|(b3+biasoffset)
                wspec((1, D)),        # gamma
                wspec((1, D)),        # beta
            ],
            out_specs=pl.BlockSpec((tm_eff, D), lambda i: (i, 0)),
        ),
        compiler_params=pltpu.CompilerParams(
            dimension_semantics=("parallel",),
            vmem_limit_bytes=int(vmem_limit)),
    )(x2d, packed["w1"], packed["b1"], packed["w23"], packed["b23"],
      packed["gamma"], packed["beta"])

    if N_pad != N:
        out2d = out2d[:N]
    return out2d.reshape(B, S, D)


def gated_transformer_layer_adapter(x, packed, *, tm=256):
    """x: (batch, seq, dim) f32. `packed`: output of pack_params()."""
    try:
        return _forward(x, packed, tm=tm, single_buffer_weights=True)
    except Exception:
        # Fallback if pipeline_mode=pl.Buffered(1) is rejected by this
        # jax/libtpu build: identical kernel with default double-buffering.
        return _forward(x, packed, tm=tm, single_buffer_weights=False)


def init_params(key, dim, hdim):
    """Deterministic synthetic parameters (Linear weights stored transposed)."""
    ks = jax.random.split(key, 6)
    scale1 = 1.0 / jnp.sqrt(dim)
    scale2 = 1.0 / jnp.sqrt(hdim)
    return {
        "w1": jax.random.uniform(ks[0], (dim, hdim), jnp.float32, -scale1, scale1),
        "b1": jax.random.uniform(ks[1], (1, hdim), jnp.float32, -scale1, scale1),
        "w2": jax.random.uniform(ks[2], (hdim, dim), jnp.float32, -scale2, scale2),
        "b2": jax.random.uniform(ks[3], (1, dim), jnp.float32, -scale2, scale2),
        "w3": jax.random.uniform(ks[4], (hdim, dim), jnp.float32, -scale2, scale2),
        "b3": jax.random.uniform(ks[5], (1, dim), jnp.float32, -scale2, scale2),
        "gamma": jnp.ones((1, dim), jnp.float32),
        "beta": jnp.zeros((1, dim), jnp.float32),
    }


def pack_params(params):
    """One-time packing: fuse w2|w3 / b2|b3, fold BIASOFFSET, cast weights bf16."""
    w23 = jnp.concatenate([params["w2"], params["w3"]], axis=1)               # (H, 2D)
    b23 = jnp.concatenate([params["b2"], params["b3"] + BIASOFFSET], axis=1)  # (1, 2D)
    return {
        "w1": params["w1"].astype(jnp.bfloat16),
        "b1": params["b1"].astype(jnp.float32),
        "w23": w23.astype(jnp.bfloat16),
        "b23": b23.astype(jnp.float32),
        "gamma": params["gamma"].astype(jnp.float32),
        "beta": params["beta"].astype(jnp.float32),
    }


def reference(x, params):
    """Pure-JAX f32 reference matching the PyTorch forward."""
    h = jax.nn.relu(x @ params["w1"] + params["b1"][0])
    x2 = h @ params["w2"] + params["b2"][0]
    z = jax.nn.sigmoid(h @ params["w3"] + params["b3"][0] + BIASOFFSET)
    y = x2 * z + x * (1.0 - z)
    mean = jnp.mean(y, axis=-1, keepdims=True)
    var = jnp.mean((y - mean) ** 2, axis=-1, keepdims=True)
    yn = (y - mean) * jax.lax.rsqrt(var + LN_EPS)
    return yn * params["gamma"][0] + params["beta"][0]


if __name__ == "__main__":
    key = jax.random.PRNGKey(0)
    k_x, k_p = jax.random.split(key)

    batch, seq, dim, hdim = 2, 8, 32, 64
    x = jax.random.normal(k_x, (batch, seq, dim), jnp.float32)
    params = init_params(k_p, dim, hdim)
    packed = pack_params(params)

    out = gated_transformer_layer_adapter(x, packed)
    out = jax.block_until_ready(out)

    ref = reference(x, params)
    assert out.shape == (batch, seq, dim)
    max_err = float(jnp.max(jnp.abs(out - ref)))
    # bf16 matmuls -> loosened tolerance vs the f32 reference.
    assert jnp.allclose(out, ref, atol=2e-2, rtol=2e-2), (
        f"mismatch vs reference (max abs err {max_err})")
    print("KERNEL_OK")
</pallas_src>

<mosaic_0001>
module attributes {stable_mosaic.version = 11 : i64} {
  func.func @_gated_adapter_kernel(%arg0: i32, %arg1: memref<8x32xf32, #tpu.memory_space<vmem>>, %arg2: memref<32x64xbf16, #tpu.memory_space<vmem>>, %arg3: memref<1x64xf32, #tpu.memory_space<vmem>>, %arg4: memref<64x64xbf16, #tpu.memory_space<vmem>>, %arg5: memref<1x64xf32, #tpu.memory_space<vmem>>, %arg6: memref<1x32xf32, #tpu.memory_space<vmem>>, %arg7: memref<1x32xf32, #tpu.memory_space<vmem>>, %arg8: memref<8x32xf32, #tpu.memory_space<vmem>>) attributes {dimension_semantics = [#tpu.dimension_semantics<parallel>], iteration_bounds = array<i64: 2>, scalar_prefetch = 0 : i64, scratch_operands = 0 : i64, tpu.core_type = #tpu.core_type<tc>, window_params = [{transform_indices = @transform_0, window_bounds = array<i64: 8, 32>}, {pipeline_mode = #tpu.pipeline_mode<synchronous>, transform_indices = @transform_1, window_bounds = array<i64: 32, 64>}, {pipeline_mode = #tpu.pipeline_mode<synchronous>, transform_indices = @transform_2, window_bounds = array<i64: 1, 64>}, {pipeline_mode = #tpu.pipeline_mode<synchronous>, transform_indices = @transform_3, window_bounds = array<i64: 64, 64>}, {pipeline_mode = #tpu.pipeline_mode<synchronous>, transform_indices = @transform_4, window_bounds = array<i64: 1, 64>}, {pipeline_mode = #tpu.pipeline_mode<synchronous>, transform_indices = @transform_5, window_bounds = array<i64: 1, 32>}, {pipeline_mode = #tpu.pipeline_mode<synchronous>, transform_indices = @transform_6, window_bounds = array<i64: 1, 32>}, {transform_indices = @transform_7, window_bounds = array<i64: 8, 32>}]} {
    %c0 = arith.constant 0 : index
    %c0_0 = arith.constant 0 : index
    %0 = vector.load %arg1[%c0, %c0_0] : memref<8x32xf32, #tpu.memory_space<vmem>>, vector<8x32xf32>
    %1 = arith.truncf %0 : vector<8x32xf32> to vector<8x32xbf16>
    %c0_1 = arith.constant 0 : index
    %c0_2 = arith.constant 0 : index
    %2 = vector.load %arg2[%c0_1, %c0_2] : memref<32x64xbf16, #tpu.memory_space<vmem>>, vector<32x64xbf16>
    %cst = arith.constant dense<0.000000e+00> : vector<8x64xf32>
    %3 = tpu.matmul %1, %2, %cst {dimension_numbers = #tpu.dot_dimension_numbers<[1], [0], [0], [1], [0, 0, 1, 1], [], []>} : vector<8x32xbf16>, vector<32x64xbf16>, vector<8x64xf32> -> vector<8x64xf32>
    %c0_3 = arith.constant 0 : index
    %c0_4 = arith.constant 0 : index
    %4 = vector.load %arg3[%c0_3, %c0_4] : memref<1x64xf32, #tpu.memory_space<vmem>>, vector<1x64xf32>
    %5 = vector.broadcast %4 : vector<1x64xf32> to vector<8x64xf32>
    %6 = arith.addf %3, %5 : vector<8x64xf32>
    %cst_5 = arith.constant 0.000000e+00 : f32
    %7 = vector.broadcast %cst_5 : f32 to vector<8x64xf32>
    %8 = arith.maximumf %6, %7 : vector<8x64xf32>
    %9 = arith.truncf %8 : vector<8x64xf32> to vector<8x64xbf16>
    %c0_6 = arith.constant 0 : index
    %c0_7 = arith.constant 0 : index
    %10 = vector.load %arg4[%c0_6, %c0_7] : memref<64x64xbf16, #tpu.memory_space<vmem>>, vector<64x64xbf16>
    %cst_8 = arith.constant dense<0.000000e+00> : vector<8x64xf32>
    %11 = tpu.matmul %9, %10, %cst_8 {dimension_numbers = #tpu.dot_dimension_numbers<[1], [0], [0], [1], [0, 0, 1, 1], [], []>} : vector<8x64xbf16>, vector<64x64xbf16>, vector<8x64xf32> -> vector<8x64xf32>
    %c0_9 = arith.constant 0 : index
    %c0_10 = arith.constant 0 : index
    %12 = vector.load %arg5[%c0_9, %c0_10] : memref<1x64xf32, #tpu.memory_space<vmem>>, vector<1x64xf32>
    %13 = vector.broadcast %12 : vector<1x64xf32> to vector<8x64xf32>
    %14 = arith.addf %11, %13 : vector<8x64xf32>
    %15 = vector.extract_strided_slice %14 {offsets = [0, 0], sizes = [8, 32], strides = [1, 1]} : vector<8x64xf32> to vector<8x32xf32>
    %16 = vector.extract_strided_slice %14 {offsets = [0, 32], sizes = [8, 32], strides = [1, 1]} : vector<8x64xf32> to vector<8x32xf32>
    %17 = arith.negf %16 : vector<8x32xf32>
    %18 = math.exp %17 : vector<8x32xf32>
    %cst_11 = arith.constant 1.000000e+00 : f32
    %19 = vector.broadcast %cst_11 : f32 to vector<8x32xf32>
    %20 = arith.addf %19, %18 : vector<8x32xf32>
    %21 = arith.divf %19, %20 : vector<8x32xf32>
    %22 = arith.mulf %15, %21 : vector<8x32xf32>
    %cst_12 = arith.constant 1.000000e+00 : f32
    %23 = vector.broadcast %cst_12 : f32 to vector<8x32xf32>
    %24 = arith.subf %23, %21 : vector<8x32xf32>
    %25 = arith.mulf %0, %24 : vector<8x32xf32>
    %26 = arith.addf %22, %25 : vector<8x32xf32>
    %cst_13 = arith.constant dense<0.000000e+00> : vector<8xf32>
    %27 = vector.multi_reduction <add>, %26, %cst_13 [1] : vector<8x32xf32> to vector<8xf32>
    %28 = vector.shape_cast %27 : vector<8xf32> to vector<8x1xf32>
    %cst_14 = arith.constant 3.200000e+01 : f32
    %29 = vector.broadcast %cst_14 : f32 to vector<8x1xf32>
    %30 = arith.divf %28, %29 : vector<8x1xf32>
    %31 = vector.broadcast %30 : vector<8x1xf32> to vector<8x32xf32>
    %32 = arith.subf %26, %31 : vector<8x32xf32>
    %33 = arith.mulf %32, %32 : vector<8x32xf32>
    %cst_15 = arith.constant dense<0.000000e+00> : vector<8xf32>
    %34 = vector.multi_reduction <add>, %33, %cst_15 [1] : vector<8x32xf32> to vector<8xf32>
    %35 = vector.shape_cast %34 : vector<8xf32> to vector<8x1xf32>
    %cst_16 = arith.constant 3.200000e+01 : f32
    %36 = vector.broadcast %cst_16 : f32 to vector<8x1xf32>
    %37 = arith.divf %35, %36 : vector<8x1xf32>
    %cst_17 = arith.constant 9.99999974E-6 : f32
    %38 = vector.broadcast %cst_17 : f32 to vector<8x1xf32>
    %39 = arith.addf %37, %38 : vector<8x1xf32>
    %40 = math.rsqrt %39 : vector<8x1xf32>
    %41 = vector.broadcast %40 : vector<8x1xf32> to vector<8x32xf32>
    %42 = arith.mulf %32, %41 : vector<8x32xf32>
    %c0_18 = arith.constant 0 : index
    %c0_19 = arith.constant 0 : index
    %43 = vector.load %arg6[%c0_18, %c0_19] : memref<1x32xf32, #tpu.memory_space<vmem>>, vector<1x32xf32>
    %44 = vector.broadcast %43 : vector<1x32xf32> to vector<8x32xf32>
    %45 = arith.mulf %42, %44 : vector<8x32xf32>
    %c0_20 = arith.constant 0 : index
    %c0_21 = arith.constant 0 : index
    %46 = vector.load %arg7[%c0_20, %c0_21] : memref<1x32xf32, #tpu.memory_space<vmem>>, vector<1x32xf32>
    %47 = vector.broadcast %46 : vector<1x32xf32> to vector<8x32xf32>
    %48 = arith.addf %45, %47 : vector<8x32xf32>
    %c0_22 = arith.constant 0 : index
    %c0_23 = arith.constant 0 : index
    %49 = vector.load %arg8[%c0_22, %c0_23] : memref<8x32xf32, #tpu.memory_space<vmem>>, vector<8x32xf32>
    tpu.vector_store %arg8[%c0_22, %c0_23], %48 {strides = array<i32>} : memref<8x32xf32, #tpu.memory_space<vmem>>, vector<8x32xf32>,
    return
  }
  func.func @transform_0(%arg0: i32) -> (i32, i32) {
    %c0_i32 = arith.constant 0 : i32
    %c0_i32_0 = arith.constant 0 : i32
    return %arg0, %c0_i32 : i32, i32
  }
  func.func @transform_1(%arg0: i32) -> (i32, i32) {
    %c0_i32 = arith.constant 0 : i32
    %c0_i32_0 = arith.constant 0 : i32
    %c0_i32_1 = arith.constant 0 : i32
    return %c0_i32, %c0_i32_0 : i32, i32
  }
  func.func @transform_2(%arg0: i32) -> (i32, i32) {
    %c0_i32 = arith.constant 0 : i32
    %c0_i32_0 = arith.constant 0 : i32
    %c0_i32_1 = arith.constant 0 : i32
    return %c0_i32, %c0_i32_0 : i32, i32
  }
  func.func @transform_3(%arg0: i32) -> (i32, i32) {
    %c0_i32 = arith.constant 0 : i32
    %c0_i32_0 = arith.constant 0 : i32
    %c0_i32_1 = arith.constant 0 : i32
    return %c0_i32, %c0_i32_0 : i32, i32
  }
  func.func @transform_4(%arg0: i32) -> (i32, i32) {
    %c0_i32 = arith.constant 0 : i32
    %c0_i32_0 = arith.constant 0 : i32
    %c0_i32_1 = arith.constant 0 : i32
    return %c0_i32, %c0_i32_0 : i32, i32
  }
  func.func @transform_5(%arg0: i32) -> (i32, i32) {
    %c0_i32 = arith.constant 0 : i32
    %c0_i32_0 = arith.constant 0 : i32
    %c0_i32_1 = arith.constant 0 : i32
    return %c0_i32, %c0_i32_0 : i32, i32
  }
  func.func @transform_6(%arg0: i32) -> (i32, i32) {
    %c0_i32 = arith.constant 0 : i32
    %c0_i32_0 = arith.constant 0 : i32
    %c0_i32_1 = arith.constant 0 : i32
    return %c0_i32, %c0_i32_0 : i32, i32
  }
  func.func @transform_7(%arg0: i32) -> (i32, i32) {
    %c0_i32 = arith.constant 0 : i32
    %c0_i32_0 = arith.constant 0 : i32
    return %arg0, %c0_i32 : i32, i32
  }
}

module attributes {stable_mosaic.version = 11 : i64} {
  func.func @_gated_adapter_kernel(%arg0: i32, %arg1: memref<8x32xf32, #tpu.memory_space<vmem>>, %arg2: memref<32x64xbf16, #tpu.memory_space<vmem>>, %arg3: memref<1x64xf32, #tpu.memory_space<vmem>>, %arg4: memref<64x64xbf16, #tpu.memory_space<vmem>>, %arg5: memref<1x64xf32, #tpu.memory_space<vmem>>, %arg6: memref<1x32xf32, #tpu.memory_space<vmem>>, %arg7: memref<1x32xf32, #tpu.memory_space<vmem>>, %arg8: memref<8x32xf32, #tpu.memory_space<vmem>>) attributes {dimension_semantics = [#tpu.dimension_semantics<parallel>], iteration_bounds = array<i64: 2>, scalar_prefetch = 0 : i64, scratch_operands = 0 : i64, tpu.core_type = #tpu.core_type<tc>, window_params = [{transform_indices = @transform_0, window_bounds = array<i64: 8, 32>}, {pipeline_mode = #tpu.pipeline_mode<synchronous>, transform_indices = @transform_1, window_bounds = array<i64: 32, 64>}, {pipeline_mode = #tpu.pipeline_mode<synchronous>, transform_indices = @transform_2, window_bounds = array<i64: 1, 64>}, {pipeline_mode = #tpu.pipeline_mode<synchronous>, transform_indices = @transform_3, window_bounds = array<i64: 64, 64>}, {pipeline_mode = #tpu.pipeline_mode<synchronous>, transform_indices = @transform_4, window_bounds = array<i64: 1, 64>}, {pipeline_mode = #tpu.pipeline_mode<synchronous>, transform_indices = @transform_5, window_bounds = array<i64: 1, 32>}, {pipeline_mode = #tpu.pipeline_mode<synchronous>, transform_indices = @transform_6, window_bounds = array<i64: 1, 32>}, {transform_indices = @transform_7, window_bounds = array<i64: 8, 32>}]} {
    %c0 = arith.constant 0 : index
    %c0_0 = arith.constant 0 : index
    %0 = vector.load %arg1[%c0, %c0_0] : memref<8x32xf32, #tpu.memory_space<vmem>>, vector<8x32xf32>
    %1 = arith.truncf %0 : vector<8x32xf32> to vector<8x32xbf16>
    %c0_1 = arith.constant 0 : index
    %c0_2 = arith.constant 0 : index
    %2 = vector.load %arg2[%c0_1, %c0_2] : memref<32x64xbf16, #tpu.memory_space<vmem>>, vector<32x64xbf16>
    %cst = arith.constant dense<0.000000e+00> : vector<8x64xf32>
    %3 = tpu.matmul %1, %2, %cst {dimension_numbers = #tpu.dot_dimension_numbers<[1], [0], [0], [1], [0, 0, 1, 1], [], []>} : vector<8x32xbf16>, vector<32x64xbf16>, vector<8x64xf32> -> vector<8x64xf32>
    %c0_3 = arith.constant 0 : index
    %c0_4 = arith.constant 0 : index
    %4 = vector.load %arg3[%c0_3, %c0_4] : memref<1x64xf32, #tpu.memory_space<vmem>>, vector<1x64xf32>
    %5 = vector.broadcast %4 : vector<1x64xf32> to vector<8x64xf32>
    %6 = arith.addf %3, %5 : vector<8x64xf32>
    %cst_5 = arith.constant 0.000000e+00 : f32
    %7 = vector.broadcast %cst_5 : f32 to vector<8x64xf32>
    %8 = arith.maximumf %6, %7 : vector<8x64xf32>
    %9 = arith.truncf %8 : vector<8x64xf32> to vector<8x64xbf16>
    %c0_6 = arith.constant 0 : index
    %c0_7 = arith.constant 0 : index
    %10 = vector.load %arg4[%c0_6, %c0_7] : memref<64x64xbf16, #tpu.memory_space<vmem>>, vector<64x64xbf16>
    %cst_8 = arith.constant dense<0.000000e+00> : vector<8x64xf32>
    %11 = tpu.matmul %9, %10, %cst_8 {dimension_numbers = #tpu.dot_dimension_numbers<[1], [0], [0], [1], [0, 0, 1, 1], [], []>} : vector<8x64xbf16>, vector<64x64xbf16>, vector<8x64xf32> -> vector<8x64xf32>
    %c0_9 = arith.constant 0 : index
    %c0_10 = arith.constant 0 : index
    %12 = vector.load %arg5[%c0_9, %c0_10] : memref<1x64xf32, #tpu.memory_space<vmem>>, vector<1x64xf32>
    %13 = vector.broadcast %12 : vector<1x64xf32> to vector<8x64xf32>
    %14 = arith.addf %11, %13 : vector<8x64xf32>
    %15 = vector.extract_strided_slice %14 {offsets = [0, 0], sizes = [8, 32], strides = [1, 1]} : vector<8x64xf32> to vector<8x32xf32>
    %16 = vector.extract_strided_slice %14 {offsets = [0, 32], sizes = [8, 32], strides = [1, 1]} : vector<8x64xf32> to vector<8x32xf32>
    %17 = arith.negf %16 : vector<8x32xf32>
    %18 = math.exp %17 : vector<8x32xf32>
    %cst_11 = arith.constant 1.000000e+00 : f32
    %19 = vector.broadcast %cst_11 : f32 to vector<8x32xf32>
    %20 = arith.addf %19, %18 : vector<8x32xf32>
    %21 = arith.divf %19, %20 : vector<8x32xf32>
    %22 = arith.mulf %15, %21 : vector<8x32xf32>
    %cst_12 = arith.constant 1.000000e+00 : f32
    %23 = vector.broadcast %cst_12 : f32 to vector<8x32xf32>
    %24 = arith.subf %23, %21 : vector<8x32xf32>
    %25 = arith.mulf %0, %24 : vector<8x32xf32>
    %26 = arith.addf %22, %25 : vector<8x32xf32>
    %cst_13 = arith.constant dense<0.000000e+00> : vector<8xf32>
    %27 = vector.multi_reduction <add>, %26, %cst_13 [1] : vector<8x32xf32> to vector<8xf32>
    %28 = vector.shape_cast %27 : vector<8xf32> to vector<8x1xf32>
    %cst_14 = arith.constant 3.200000e+01 : f32
    %29 = vector.broadcast %cst_14 : f32 to vector<8x1xf32>
    %30 = arith.divf %28, %29 : vector<8x1xf32>
    %31 = vector.broadcast %30 : vector<8x1xf32> to vector<8x32xf32>
    %32 = arith.subf %26, %31 : vector<8x32xf32>
    %33 = arith.mulf %32, %32 : vector<8x32xf32>
    %cst_15 = arith.constant dense<0.000000e+00> : vector<8xf32>
    %34 = vector.multi_reduction <add>, %33, %cst_15 [1] : vector<8x32xf32> to vector<8xf32>
    %35 = vector.shape_cast %34 : vector<8xf32> to vector<8x1xf32>
    %cst_16 = arith.constant 3.200000e+01 : f32
    %36 = vector.broadcast %cst_16 : f32 to vector<8x1xf32>
    %37 = arith.divf %35, %36 : vector<8x1xf32>
    %cst_17 = arith.constant 9.99999974E-6 : f32
    %38 = vector.broadcast %cst_17 : f32 to vector<8x1xf32>
    %39 = arith.addf %37, %38 : vector<8x1xf32>
    %40 = math.rsqrt %39 : vector<8x1xf32>
    %41 = vector.broadcast %40 : vector<8x1xf32> to vector<8x32xf32>
    %42 = arith.mulf %32, %41 : vector<8x32xf32>
    %c0_18 = arith.constant 0 : index
    %c0_19 = arith.constant 0 : index
    %43 = vector.load %arg6[%c0_18, %c0_19] : memref<1x32xf32, #tpu.memory_space<vmem>>, vector<1x32xf32>
    %44 = vector.broadcast %43 : vector<1x32xf32> to vector<8x32xf32>
    %45 = arith.mulf %42, %44 : vector<8x32xf32>
    %c0_20 = arith.constant 0 : index
    %c0_21 = arith.constant 0 : index
    %46 = vector.load %arg7[%c0_20, %c0_21] : memref<1x32xf32, #tpu.memory_space<vmem>>, vector<1x32xf32>
    %47 = vector.broadcast %46 : vector<1x32xf32> to vector<8x32xf32>
    %48 = arith.addf %45, %47 : vector<8x32xf32>
    %c0_22 = arith.constant 0 : index
    %c0_23 = arith.constant 0 : index
    %49 = vector.load %arg8[%c0_22, %c0_23] : memref<8x32xf32, #tpu.memory_space<vmem>>, vector<8x32xf32>
    tpu.vector_store %arg8[%c0_22, %c0_23], %48 {strides = array<i32>} : memref<8x32xf32, #tpu.memory_space<vmem>>, vector<8x32xf32>,
    return
  }
  func.func @transform_0(%arg0: i32) -> (i32, i32) {
    %c0_i32 = arith.constant 0 : i32
    %c0_i32_0 = arith.constant 0 : i32
    return %arg0, %c0_i32 : i32, i32
  }
  func.func @transform_1(%arg0: i32) -> (i32, i32) {
    %c0_i32 = arith.constant 0 : i32
    %c0_i32_0 = arith.constant 0 : i32
    %c0_i32_1 = arith.constant 0 : i32
    return %c0_i32, %c0_i32_0 : i32, i32
  }
  func.func @transform_2(%arg0: i32) -> (i32, i32) {
    %c0_i32 = arith.constant 0 : i32
    %c0_i32_0 = arith.constant 0 : i32
    %c0_i32_1 = arith.constant 0 : i32
    return %c0_i32, %c0_i32_0 : i32, i32
  }
  func.func @transform_3(%arg0: i32) -> (i32, i32) {
    %c0_i32 = arith.constant 0 : i32
    %c0_i32_0 = arith.constant 0 : i32
    %c0_i32_1 = arith.constant 0 : i32
    return %c0_i32, %c0_i32_0 : i32, i32
  }
  func.func @transform_4(%arg0: i32) -> (i32, i32) {
    %c0_i32 = arith.constant 0 : i32
    %c0_i32_0 = arith.constant 0 : i32
    %c0_i32_1 = arith.constant 0 : i32
    return %c0_i32, %c0_i32_0 : i32, i32
  }
  func.func @transform_5(%arg0: i32) -> (i32, i32) {
    %c0_i32 = arith.constant 0 : i32
    %c0_i32_0 = arith.constant 0 : i32
    %c0_i32_1 = arith.constant 0 : i32
    return %c0_i32, %c0_i32_0 : i32, i32
  }
  func.func @transform_6(%arg0: i32) -> (i32, i32) {
    %c0_i32 = arith.constant 0 : i32
    %c0_i32_0 = arith.constant 0 : i32
    %c0_i32_1 = arith.constant 0 : i32
    return %c0_i32, %c0_i32_0 : i32, i32
  }
  func.func @transform_7(%arg0: i32) -> (i32, i32) {
    %c0_i32 = arith.constant 0 : i32
    %c0_i32_0 = arith.constant 0 : i32
    return %arg0, %c0_i32 : i32, i32
  }
}

</mosaic_0001>

<llo_original>
// kernel: _forward.1
$region0: #{_forward.1}
  #allocation0 [shape = 'u32[]', space=smem, size = 0x4, offset = 0x4, fixed_abs, tag = 'smem constant byte address 0x4 - core index']
  #allocation1 [shape = 'u32[72,128]{1,0:T(1,128)}', space=vmem, size = 0x9000, scoped, tag = 'internal scratch']
  %s0 = inlined_call_operand.hbm [shape: f32[16,32], index: 0, kind: input, shape index: {}]
  %s1 = inlined_call_operand.hbm [shape: bf16[32,64], index: 1, kind: input, shape index: {}]
  %s2 = inlined_call_operand.vmem [shape: f32[1,64], index: 2, kind: input, shape index: {}]
  %s3 = inlined_call_operand.hbm [shape: bf16[64,64], index: 3, kind: input, shape index: {}]
  %s4 = inlined_call_operand.vmem [shape: f32[1,64], index: 4, kind: input, shape index: {}]
  %s5 = inlined_call_operand.vmem [shape: f32[1,32], index: 5, kind: input, shape index: {}]
  %s6 = inlined_call_operand.hbm [shape: f32[1,32], index: 6, kind: input, shape index: {}]
  %s7 = inlined_call_operand.hbm [shape: f32[16,32], index: 7, kind: output, shape index: {}]
  %s8 = sld [smem:[#allocation0]]
  $region77: #{_forward.1} parent=0
    _
  %s10 = ssub.s32 1, %s8
  %s11 = scalar_select 0, %s10, %s8
  $region1: #{_forward.1} parent=0
    #allocation2 [shape = 'u8[8192]{0}', space=vmem, size = 0x2000, scoped, tag = 'input window, operand 0']
    #allocation3 [shape = 's32[2]{0}', space=sflag, size = 0x8, scoped, tag = 'scoped memory for _forward.1']
    #allocation4 [shape = 's32[2]{0}', space=sflag, size = 0x8, scoped, tag = 'scoped memory for _forward.1']
    #allocation5 [shape = 'u8[8192]{0}', space=vmem, size = 0x2000, scoped, tag = 'input window, operand 1, single buffered']
    #allocation6 [shape = 's32[1]{0}', space=sflag, size = 0x4, scoped, tag = 'scoped memory for _forward.1']
    #allocation7 [shape = 'u8[16384]{0}', space=vmem, size = 0x4000, scoped, tag = 'input window, operand 3, single buffered']
    #allocation8 [shape = 'u8[512]{0}', space=vmem, size = 0x400, scoped, tag = 'input window, operand 6, single buffered']
    #allocation9 [shape = 's32[1]{0}', space=sflag, size = 0x4, scoped, tag = 'scoped memory for _forward.1']
    #allocation10 [shape = 'u8[8192]{0}', space=vmem, size = 0x2000, scoped, tag = 'output window, operand 0']
    %12 = vsyncpa [#allocation3], 0
    %s13 = scalar_lea.sflag [#allocation3], 1
    %14 = vsyncpa %s13, 0
    %15 = vsyncpa [#allocation6], 0
    %16 = vsyncpa [#allocation9], 0
    %17 = vsyncpa [#allocation4], 0
    %s18 = scalar_lea.sflag [#allocation4], 1
    %19 = vsyncpa %s18, 0
    loop: start=0, step=1, limit=4
    $region2: #{_forward.1} parent=1 // loop_pre_header
      _
    $region3: #{_forward.1} parent=1 // loop_header
      %s21 = sphi 0, %s25
      %p22 = scmp.ge.s32.totalorder %s21, 4
      %s31 = sphi 0, %s33
      %s34 = sphi 0, %s31
      %s35 = sphi 0, %s34
      %s51 = sphi 0, %s35
      %s55 = sphi 0, %s55
      %s57 = sphi 0, %s55
      %s58 = sphi 0, %s57
      %s72 = sphi 0, %s58
      %s76 = sphi 0, %s76
      %s78 = sphi 0, %s76
      %s79 = sphi 0, %s78
      %s93 = sphi 0, %s79
      %s97 = sphi 0, %s97
      %s99 = sphi 0, %s97
      %s100 = sphi 0, %s99
      %s114 = sphi 0, %s100
      %s118 = sphi 0, %s118
      %s120 = sphi 0, %s118
      %s121 = sphi 0, %s120
      %s135 = sphi 0, %s121
      %s139 = sphi 0, %s139
      %s141 = sphi 0, %s139
      %s142 = sphi 0, %s141
      %s156 = sphi 0, %s142
      %s160 = sphi 0, %s160
      %s162 = sphi 0, %s160
      %s163 = sphi 0, %s162
      %s177 = sphi 0, %s163
      %s183 = sphi 0, %s185
      %s186 = sphi 0, %s183
      %s187 = sphi 0, %s186
      %s203 = sphi 0, %s187
    $region4: #{_forward.1} parent=1 // loop_header_branch
      %24 = sbr.rel (%p22) target = $region8
    $region5: #{_forward.1} parent=1 // loop_body
      %s26 = ssub.s32 %s21, 1
      %s27 = ssub.s32 %s21, 2
      %s28 = sadd.s32 %s21, 1
      %s29 = ssub.s32 %s21, %s28
      %p30 = scmp.eq.s32.totalorder %s29, 0
      %s32 = sadd.s32 %s31, 1
      %s33 = scalar_select %p30, %s31, %s32
      %p36 = pneg %p30
      %p37 = scmp.eq.s32.totalorder %s21, 1
      %p38 = por %p36, %p37
      %p39 = scmp.ne.s32.totalorder %s31, %s34
      %p40 = scmp.eq.s32.totalorder %s21, 0
      %p41 = por %p39, %p40
      %p42 = scmp.ne.s32.totalorder %s31, %s34
      %p43 = scmp.eq.s32.totalorder %s26, 1
      %p44 = por %p42, %p43
      %p45 = scmp.ne.s32.totalorder %s34, %s35
      %p46 = scmp.eq.s32.totalorder %s26, 0
      %p47 = por %p45, %p46
      %p48 = scmp.ne.s32.totalorder %s34, %s35
      %p49 = scmp.eq.s32.totalorder %s27, 1
      %p50 = por %p48, %p49
      %p52 = scmp.ne.s32.totalorder %s35, %s51
      %p53 = scmp.eq.s32.totalorder %s27, 0
      %p54 = por %p52, %p53
      %s56 = sadd.s32 %s55, 1
      %p59 = scmp.eq.s32.totalorder %s21, 1
      %p60 = scmp.ne.s32.totalorder %s55, %s57
      %p61 = scmp.eq.s32.totalorder %s21, 0
      %p62 = por %p60, %p61
      %p63 = scmp.ne.s32.totalorder %s55, %s57
      %p64 = scmp.eq.s32.totalorder %s26, 1
      %p65 = por %p63, %p64
      %p66 = scmp.ne.s32.totalorder %s57, %s58
      %p67 = scmp.eq.s32.totalorder %s26, 0
      %p68 = por %p66, %p67
      %p69 = scmp.ne.s32.totalorder %s57, %s58
      %p70 = scmp.eq.s32.totalorder %s27, 1
      %p71 = por %p69, %p70
      %p73 = scmp.ne.s32.totalorder %s58, %s72
      %p74 = scmp.eq.s32.totalorder %s27, 0
      %p75 = por %p73, %p74
      %s77 = sadd.s32 %s76, 1
      %p80 = scmp.eq.s32.totalorder %s21, 1
      %p81 = scmp.ne.s32.totalorder %s76, %s78
      %p82 = scmp.eq.s32.totalorder %s21, 0
      %p83 = por %p81, %p82
      %p84 = scmp.ne.s32.totalorder %s76, %s78
      %p85 = scmp.eq.s32.totalorder %s26, 1
      %p86 = por %p84, %p85
      %p87 = scmp.ne.s32.totalorder %s78, %s79
      %p88 = scmp.eq.s32.totalorder %s26, 0
      %p89 = por %p87, %p88
      %p90 = scmp.ne.s32.totalorder %s78, %s79
      %p91 = scmp.eq.s32.totalorder %s27, 1
      %p92 = por %p90, %p91
      %p94 = scmp.ne.s32.totalorder %s79, %s93
      %p95 = scmp.eq.s32.totalorder %s27, 0
      %p96 = por %p94, %p95
      %s98 = sadd.s32 %s97, 1
      %p101 = scmp.eq.s32.totalorder %s21, 1
      %p102 = scmp.ne.s32.totalorder %s97, %s99
      %p103 = scmp.eq.s32.totalorder %s21, 0
      %p104 = por %p102, %p103
      %p105 = scmp.ne.s32.totalorder %s97, %s99
      %p106 = scmp.eq.s32.totalorder %s26, 1
      %p107 = por %p105, %p106
      %p108 = scmp.ne.s32.totalorder %s99, %s100
      %p109 = scmp.eq.s32.totalorder %s26, 0
      %p110 = por %p108, %p109
      %p111 = scmp.ne.s32.totalorder %s99, %s100
      %p112 = scmp.eq.s32.totalorder %s27, 1
      %p113 = por %p111, %p112
      %p115 = scmp.ne.s32.totalorder %s100, %s114
      %p116 = scmp.eq.s32.totalorder %s27, 0
      %p117 = por %p115, %p116
      %s119 = sadd.s32 %s118, 1
      %p122 = scmp.eq.s32.totalorder %s21, 1
      %p123 = scmp.ne.s32.totalorder %s118, %s120
      %p124 = scmp.eq.s32.totalorder %s21, 0
      %p125 = por %p123, %p124
      %p126 = scmp.ne.s32.totalorder %s118, %s120
      %p127 = scmp.eq.s32.totalorder %s26, 1
      %p128 = por %p126, %p127
      %p129 = scmp.ne.s32.totalorder %s120, %s121
      %p130 = scmp.eq.s32.totalorder %s26, 0
      %p131 = por %p129, %p130
      %p132 = scmp.ne.s32.totalorder %s120, %s121
      %p133 = scmp.eq.s32.totalorder %s27, 1
      %p134 = por %p132, %p133
      %p136 = scmp.ne.s32.totalorder %s121, %s135
      %p137 = scmp.eq.s32.totalorder %s27, 0
      %p138 = por %p136, %p137
      %s140 = sadd.s32 %s139, 1
      %p143 = scmp.eq.s32.totalorder %s21, 1
      %p144 = scmp.ne.s32.totalorder %s139, %s141
      %p145 = scmp.eq.s32.totalorder %s21, 0
      %p146 = por %p144, %p145
      %p147 = scmp.ne.s32.totalorder %s139, %s141
      %p148 = scmp.eq.s32.totalorder %s26, 1
      %p149 = por %p147, %p148
      %p150 = scmp.ne.s32.totalorder %s141, %s142
      %p151 = scmp.eq.s32.totalorder %s26, 0
      %p152 = por %p150, %p151
      %p153 = scmp.ne.s32.totalorder %s141, %s142
      %p154 = scmp.eq.s32.totalorder %s27, 1
      %p155 = por %p153, %p154
      %p157 = scmp.ne.s32.totalorder %s142, %s156
      %p158 = scmp.eq.s32.totalorder %s27, 0
      %p159 = por %p157, %p158
      %s161 = sadd.s32 %s160, 1
      %p164 = scmp.eq.s32.totalorder %s21, 1
      %p165 = scmp.ne.s32.totalorder %s160, %s162
      %p166 = scmp.eq.s32.totalorder %s21, 0
      %p167 = por %p165, %p166
      %p168 = scmp.ne.s32.totalorder %s160, %s162
      %p169 = scmp.eq.s32.totalorder %s26, 1
      %p170 = por %p168, %p169
      %p171 = scmp.ne.s32.totalorder %s162, %s163
      %p172 = scmp.eq.s32.totalorder %s26, 0
      %p173 = por %p171, %p172
      %p174 = scmp.ne.s32.totalorder %s162, %s163
      %p175 = scmp.eq.s32.totalorder %s27, 1
      %p176 = por %p174, %p175
      %p178 = scmp.ne.s32.totalorder %s163, %s177
      %p179 = scmp.eq.s32.totalorder %s27, 0
      %p180 = por %p178, %p179
      %s181 = ssub.s32 %s21, %s28
      %p182 = scmp.eq.s32.totalorder %s181, 0
      %s184 = sadd.s32 %s183, 1
      %s185 = scalar_select %p182, %s183, %s184
      %p188 = pneg %p182
      %p189 = scmp.eq.s32.totalorder %s21, 1
      %p190 = por %p188, %p189
      %p191 = scmp.ne.s32.totalorder %s183, %s186
      %p192 = scmp.eq.s32.totalorder %s21, 0
      %p193 = por %p191, %p192
      %p194 = scmp.ne.s32.totalorder %s183, %s186
      %p195 = scmp.eq.s32.totalorder %s26, 1
      %p196 = por %p194, %p195
      %p197 = scmp.ne.s32.totalorder %s186, %s187
      %p198 = scmp.eq.s32.totalorder %s26, 0
      %p199 = por %p197, %p198
      %p200 = scmp.ne.s32.totalorder %s186, %s187
      %p201 = scmp.eq.s32.totalorder %s27, 1
      %p202 = por %p200, %p201
      %p204 = scmp.ne.s32.totalorder %s187, %s203
      %p205 = scmp.eq.s32.totalorder %s27, 0
      %p206 = por %p204, %p205
      %p207 = scmp.le.s32.totalorder 1, %s21
      %p208 = scmp.lt.s32.totalorder %s21, 3
      %p209 = pnand %p207, %p208
      %p210 = pneg %p209
      // Predicated region
      $region9: #{_forward.1} parent=5 // pred_check
        _
      $region10: #{_forward.1} parent=5 // pred_check_branch
        %212 = sbr.rel (%p209) target = $region12
      $region11: #{_forward.1} parent=5 // pred_region
        %s213 = ssub.s32 %s21, 1
        // Predicated region
        $region13: #{_forward.1} parent=11 // pred_check
          %p214 = pneg %p68
        $region14: #{_forward.1} parent=11 // pred_check_branch
          %216 = sbr.rel (%p214) target = $region16
        $region15: #{_forward.1} parent=11 // pred_region
          %218 = vsyncadd [#allocation6], 0
          %s219 = sshll.u32 %s1, 4
          %s220 = int_to_ptr.hbm [resolvable:$true] %s219
          %s221 = sshll.u32 [#allocation5], 4
          %s222 = int_to_ptr.vmem [resolvable:$true] %s221
          %227 = dma.hbm_to_vmem [thread:$0]  %s220, 256, %s222, [#allocation6], 64, 64, 4
        $region16: #{_forward.1} parent=11 // pred_fallthru
          _
        // Predicated region
        $region17: #{_forward.1} parent=11 // pred_check
          %p228 = pneg %p89
        $region18: #{_forward.1} parent=11 // pred_check_branch
          %230 = sbr.rel (%p228) target = $region20
        $region19: #{_forward.1} parent=11 // pred_region
          _
        $region20: #{_forward.1} parent=11 // pred_fallthru
          _
        // Predicated region
        $region21: #{_forward.1} parent=11 // pred_check
          %p231 = pneg %p110
        $region22: #{_forward.1} parent=11 // pred_check_branch
          %233 = sbr.rel (%p231) target = $region24
        $region23: #{_forward.1} parent=11 // pred_region
          %235 = vsyncadd [#allocation6], 0
          %s236 = sshll.u32 %s3, 4
          %s237 = int_to_ptr.hbm [resolvable:$true] %s236
          %s238 = sshll.u32 [#allocation7], 4
          %s239 = int_to_ptr.vmem [resolvable:$true] %s238
          %244 = dma.hbm_to_vmem [thread:$0]  %s237, 512, %s239, [#allocation6], 64, 64, 4
        $region24: #{_forward.1} parent=11 // pred_fallthru
          _
        // Predicated region
        $region25: #{_forward.1} parent=11 // pred_check
          %p245 = pneg %p131
        $region26: #{_forward.1} parent=11 // pred_check_branch
          %247 = sbr.rel (%p245) target = $region28
        $region27: #{_forward.1} parent=11 // pred_region
          _
        $region28: #{_forward.1} parent=11 // pred_fallthru
          _
        // Predicated region
        $region29: #{_forward.1} parent=11 // pred_check
          %p248 = pneg %p152
        $region30: #{_forward.1} parent=11 // pred_check_branch
          %250 = sbr.rel (%p248) target = $region32
        $region31: #{_forward.1} parent=11 // pred_region
          _
        $region32: #{_forward.1} parent=11 // pred_fallthru
          _
        // Predicated region
        $region33: #{_forward.1} parent=11 // pred_check
          %p251 = pneg %p173
        $region34: #{_forward.1} parent=11 // pred_check_branch
          %253 = sbr.rel (%p251) target = $region36
        $region35: #{_forward.1} parent=11 // pred_region
          %255 = vsyncadd [#allocation9], 0
          %s257 = sshll.u32 %s6, 4
          %s258 = int_to_ptr.hbm [resolvable:$true] %s257
          %s259 = sshll.u32 [#allocation8], 4
          %s260 = int_to_ptr.vmem [resolvable:$true] %s259
          %262 = dma.hbm_to_vmem [thread:$0]  %s258, 16, %s260, [#allocation9]
        $region36: #{_forward.1} parent=11 // pred_fallthru
          _
      $region12: #{_forward.1} parent=5 // pred_fallthru
        _
      %p263 = scmp.lt.s32.totalorder %s21, 2
      // Predicated region
      $region37: #{_forward.1} parent=5 // pred_check
        %p264 = pneg %p263
      $region38: #{_forward.1} parent=5 // pred_check_branch
        %266 = sbr.rel (%p264) target = $region40
      $region39: #{_forward.1} parent=5 // pred_region
        // Predicated region
        $region41: #{_forward.1} parent=39 // pred_check
          %p267 = pneg %p41
        $region42: #{_forward.1} parent=39 // pred_check_branch
          %269 = sbr.rel (%p267) target = $region44
        $region43: #{_forward.1} parent=39 // pred_region
          %s270 = sand.u32 %s31, 1
          %s271 = scalar_lea.sflag [#allocation3], %s270
          %s272 = sand.u32 %s31, 1
          %s273 = smul.addr %s272, 8
          %s274 = scalar_lea.vmem [#allocation2], %s273
          %276 = vsyncadd %s271, 0
          %s277 = smul.addr %s21, 8
          %s278 = scalar_lea.hbm %s0, %s277
          %s280 = sshll.u32 %s278, 4
          %s281 = int_to_ptr.hbm [resolvable:$true] %s280
          %s282 = sshll.u32 %s274, 4
          %s283 = int_to_ptr.vmem [resolvable:$true] %s282
          %285 = dma.hbm_to_vmem [thread:$0]  %s281, 128, %s283, %s271
        $region44: #{_forward.1} parent=39 // pred_fallthru
          _
      $region40: #{_forward.1} parent=5 // pred_fallthru
        _
      %p286 = scmp.le.s32.totalorder 1, %s21
      %p287 = scmp.lt.s32.totalorder %s21, 3
      %p288 = pnand %p286, %p287
      %p289 = pneg %p288
      // Predicated region
      $region45: #{_forward.1} parent=5 // pred_check
        _
      $region46: #{_forward.1} parent=5 // pred_check_branch
        %291 = sbr.rel (%p288) target = $region48
      $region47: #{_forward.1} parent=5 // pred_region
        %s292 = ssub.s32 %s21, 1
        %s293 = sand.u32 %s34, 1
        %s294 = scalar_lea.sflag [#allocation3], %s293
        %s295 = sand.u32 %s34, 1
        %s296 = smul.addr %s295, 8
        %s297 = scalar_lea.vmem [#allocation2], %s296
        // Predicated region
        $region49: #{_forward.1} parent=47 // pred_check
          %p298 = pneg %p47
        $region50: #{_forward.1} parent=47 // pred_check_branch
          %300 = sbr.rel (%p298) target = $region52
        $region51: #{_forward.1} parent=47 // pred_region
          %302 = dma.done %s294, 128
        $region52: #{_forward.1} parent=47 // pred_fallthru
          _
        // Predicated region
        $region53: #{_forward.1} parent=47 // pred_check
          %p303 = pneg %p68
        $region54: #{_forward.1} parent=47 // pred_check_branch
          %305 = sbr.rel (%p303) target = $region56
        $region55: #{_forward.1} parent=47 // pred_region
          %307 = dma.done [#allocation6], 256
        $region56: #{_forward.1} parent=47 // pred_fallthru
          _
        // Predicated region
        $region57: #{_forward.1} parent=47 // pred_check
          %p308 = pneg %p110
        $region58: #{_forward.1} parent=47 // pred_check_branch
          %310 = sbr.rel (%p308) target = $region60
        $region59: #{_forward.1} parent=47 // pred_region
          %312 = dma.done [#allocation6], 512
        $region60: #{_forward.1} parent=47 // pred_fallthru
          _
        // Predicated region
        $region61: #{_forward.1} parent=47 // pred_check
          %p313 = pneg %p173
        $region62: #{_forward.1} parent=47 // pred_check_branch
          %315 = sbr.rel (%p313) target = $region64
        $region63: #{_forward.1} parent=47 // pred_region
          %317 = dma.done [#allocation9], 16
        $region64: #{_forward.1} parent=47 // pred_fallthru
          _
        %s318 = sand.u32 %s34, 1
        %s319 = scalar_lea.sflag [#allocation3], %s318
        %s320 = sand.u32 %s34, 1
        %s321 = smul.addr %s320, 8
        %s322 = scalar_lea.vmem [#allocation2], %s321
        %p323 = pneg %p47
        %p324 = pneg %p44
        %p325 = pneg %p68
        %p326 = pneg %p65
        %p327 = pneg %p89
        %p328 = pneg %p86
        %p329 = pneg %p110
        %p330 = pneg %p107
        %p331 = pneg %p131
        %p332 = pneg %p128
        %p333 = pneg %p152
        %p334 = pneg %p149
        %p335 = pneg %p173
        %p336 = pneg %p170
        %p337 = pneg %p199
        %p338 = pneg %p196
        %s339 = sand.u32 %s186, 1
        %s340 = scalar_lea.sflag [#allocation4], %s339
        %s341 = sand.u32 %s186, 1
        %s342 = smul.addr %s341, 8
        %s343 = scalar_lea.vmem [#allocation10], %s342
        %v345 = vld [vmem:[%s297] sm:$0xff]
        %v346 = vpack.c.bf16 %v345, %v345
        %v347 = vld [vmem:[#allocation5] sm:$0xf]
        %v348 = vld [vmem:[#allocation5 + $0x4] sm:$0xf]
        %v349 = vld [vmem:[#allocation5 + $0x8] sm:$0xf]
        %v350 = vld [vmem:[#allocation5 + $0xc] sm:$0xf]
        %v351 = vld [vmem:[%s2] sm:$0x1]
        %v353 = vperm.slane %v351, 0
        %v359 = vunpack.c.l.b16 %v347
        %v360 = vunpack.c.l.b16 %v348
        %v361 = vunpack.c.l.b16 %v349
        %v362 = vunpack.c.l.b16 %v350
        %v363 = vpack.c.b16 %v360, %v359
        %v364 = vpack.c.b16 %v362, %v361
        %vm367 = vcmask 261120
        %v369 = vsel %vm367, %v346, 0
        %371 = vmatpush.bf16.msra.mxu0 0
        %372 = vmatpush.bf16.msra.mxu0 0
        %373 = vmatpush.bf16.msra.mxu0 0
        %374 = vmatpush.bf16.msra.mxu0 0
        %375 = vmatpush.bf16.msra.mxu0 0
        %376 = vmatpush.bf16.msra.mxu0 0
        %377 = vmatpush.bf16.msra.mxu0 %v364
        %378 = vmatpush.bf16.msra.mxu0 %v363
        %379 = vmatmul.bf16.gmra.mxu0 %v369
        %v380 = vpop.f32.mrf.mxu0
        %v381 = vadd.f32 %v353, %v380
        %v382 = vpop.f32.mrf.mxu0
        %383 = vdwg.mxu0
        %v384 = vmax.f32 %v381, 0.0
        %v385 = vpack.c.bf16 %v384, %v384
        %v386 = vld [vmem:[#allocation7] sm:$0xf]
        %v387 = vld [vmem:[#allocation7 + $0x4] sm:$0xf]
        %v388 = vld [vmem:[#allocation7 + $0x8] sm:$0xf]
        %v389 = vld [vmem:[#allocation7 + $0xc] sm:$0xf]
        %v390 = vld [vmem:[#allocation7 + $0x10] sm:$0xf]
        %v391 = vld [vmem:[#allocation7 + $0x14] sm:$0xf]
        %v392 = vld [vmem:[#allocation7 + $0x18] sm:$0xf]
        %v393 = vld [vmem:[#allocation7 + $0x1c] sm:$0xf]
        %v394 = vld [vmem:[%s4] sm:$0x1]
        %v396 = vperm.slane %v394, 0
        %v406 = vunpack.c.l.b16 %v386
        %v407 = vunpack.c.l.b16 %v387
        %v408 = vunpack.c.l.b16 %v388
        %v409 = vunpack.c.l.b16 %v389
        %v410 = vunpack.c.l.b16 %v390
        %v411 = vunpack.c.l.b16 %v391
        %v412 = vunpack.c.l.b16 %v392
        %v413 = vunpack.c.l.b16 %v393
        %v414 = vpack.c.b16 %v407, %v406
        %v415 = vpack.c.b16 %v409, %v408
        %v416 = vpack.c.b16 %v411, %v410
        %v417 = vpack.c.b16 %v413, %v412
        %vm422 = vcmask 523264
        %v424 = vsel %vm422, %v385, 0
        %426 = vmatpush.bf16.msra.mxu0 0
        %427 = vmatpush.bf16.msra.mxu0 0
        %428 = vmatpush.bf16.msra.mxu0 0
        %429 = vmatpush.bf16.msra.mxu0 0
        %430 = vmatpush.bf16.msra.mxu0 %v417
        %431 = vmatpush.bf16.msra.mxu0 %v416
        %432 = vmatpush.bf16.msra.mxu0 %v415
        %433 = vmatpush.bf16.msra.mxu0 %v414
        %434 = vmatmul.bf16.gmra.mxu0 %v424
        %v435 = vpop.f32.mrf.mxu0
        %v436 = vadd.f32 %v396, %v435
        %v437 = vpop.f32.mrf.mxu0
        %438 = vdwg.mxu0
        %v439 = vxor.u32 %v436, 2147483648
        %v440 = vmul.f32 %v439, 1.442695
        %v441 = vpow.pop %v440
        %v442 = vadd.f32 %v441, 1.0
        %v443 = vrcp.pop %v442
        %v444 = vmul.f32 %v442, %v443
        %v445 = vsub.f32 1.0, %v444
        %v446 = vmul.f32 %v443, %v445
        %v447 = vadd.f32 %v443, %v446
        %vm448 = vweird.f32 %v442
        %vm449 = vweird.f32 %v443
        %vm450 = vmor %vm448, %vm449
        %v451 = vsel %vm450, %v443, %v447
        %v452 = vand.u32 2147483647, %v442
        %vm453 = vcmp.eq.f32.partialorder %v452, 8.507059e+37
        %v454 = vand.u32 %v442, 2147483648
        %v455 = vor.u32 1.1754944e-38, %v454
        %v456 = vsel %vm453, %v455, %v451
        %v457 = vmul.f32 1.0, %v456
        %459 = vrot.lane.b32.xlu0 %v457, 96
        %v460 = vpop.permute.xlu0 %459
        %v462 = vmul.f32 %v436, %v460
        %v463 = vsub.f32 1.0, %v457
        %465 = vrot.lane.b32.xlu0 %v463, 96
        %v466 = vpop.permute.xlu0 %465
        %v468 = vmul.f32 %v345, %v466
        %v469 = vadd.f32 %v462, %v468
        %v470 = vsel %vm367, %v469, 0.0
        %471 = vadd.xlane.f32.xlu0 %v470
        %v472 = vpop.xlane.xlu0 %471
        %v473 = vrcp.pop 32.0
        %v474 = vmul.f32 32.0, %v473
        %v475 = vsub.f32 1.0, %v474
        %v476 = vmul.f32 %v473, %v475
        %v477 = vadd.f32 %v473, %v476
        %vm478 = vweird.f32 %v473
        %v479 = vsel %vm478, %v473, %v477
        %v480 = vmul.f32 %v472, %v479
        %v481 = vsub.f32 %v469, %v480
        %v482 = vmul.f32 %v481, %v481
        %v483 = vsel %vm367, %v482, 0.0
        %484 = vadd.xlane.f32.xlu0 %v483
        %v485 = vpop.xlane.xlu0 %484
        %v486 = vmul.f32 %v485, %v479
        %v487 = vadd.f32 %v486, 1e-05
        %v488 = vrsqrt.pop %v487
        %v489 = vmul.f32 %v488, %v487
        %v490 = vmul.f32 %v489, %v488
        %v491 = vmul.f32 0.5, %v490
        %v492 = vsub.f32 1.5, %v491
        %v493 = vmul.f32 %v488, %v492
        %vm494 = vweird.f32 %v487
        %vm495 = vweird.f32 %v488
        %vm496 = vmor %vm494, %vm495
        %v497 = vsel %vm496, %v488, %v493
        %v498 = vmul.f32 %v481, %v497
        %v499 = vld [vmem:[%s5] sm:$0x1]
        %v501 = vperm.slane %v499, 0
        %v503 = vmul.f32 %v498, %v501
        %v504 = vld [vmem:[#allocation8] sm:$0x1]
        %v506 = vperm.slane %v504, 0
        %v508 = vadd.f32 %v503, %v506
        %509 = vst.msk [vmem:[%s343] sm:$0xff] %vm367, %v508
        %s510 = sand.u32 %s186, 1
        %s511 = scalar_lea.sflag [#allocation4], %s510
        %s512 = sand.u32 %s186, 1
        %s513 = smul.addr %s512, 8
        %s514 = scalar_lea.vmem [#allocation10], %s513
        // Predicated region
        $region65: #{_forward.1} parent=47 // pred_check
          %p515 = pneg %p196
        $region66: #{_forward.1} parent=47 // pred_check_branch
          %517 = sbr.rel (%p515) target = $region68
        $region67: #{_forward.1} parent=47 // pred_region
          %519 = vsyncadd %s511, 0
          %s520 = smul.addr %s26, 8
          %s521 = scalar_lea.hbm %s7, %s520
          %s523 = sshll.u32 %s514, 4
          %s524 = int_to_ptr.vmem [resolvable:$true] %s523
          %s525 = sshll.u32 %s521, 4
          %s526 = int_to_ptr.hbm [resolvable:$true] %s525
          %528 = dma.vmem_to_hbm [thread:$0]  %s524, 128, %s526, %s511
        $region68: #{_forward.1} parent=47 // pred_fallthru
          _
      $region48: #{_forward.1} parent=5 // pred_fallthru
        _
      %p529 = scmp.le.s32.totalorder 2, %s21
      // Predicated region
      $region69: #{_forward.1} parent=5 // pred_check
        %p530 = pneg %p529
      $region70: #{_forward.1} parent=5 // pred_check_branch
        %532 = sbr.rel (%p530) target = $region72
      $region71: #{_forward.1} parent=5 // pred_region
        %s533 = ssub.s32 %s21, 2
        // Predicated region
        $region73: #{_forward.1} parent=71 // pred_check
          %p534 = pneg %p202
        $region74: #{_forward.1} parent=71 // pred_check_branch
          %536 = sbr.rel (%p534) target = $region76
        $region75: #{_forward.1} parent=71 // pred_region
          %s537 = sand.u32 %s187, 1
          %s538 = scalar_lea.sflag [#allocation4], %s537
          %s539 = sand.u32 %s187, 1
          %s540 = smul.addr %s539, 8
          %s541 = scalar_lea.vmem [#allocation10], %s540
          %543 = dma.done %s538, 128
        $region76: #{_forward.1} parent=71 // pred_fallthru
          _
      $region72: #{_forward.1} parent=5 // pred_fallthru
        _
    $region6: #{_forward.1} parent=1 // loop_footer
      %s25 = sadd.s32 1, %s21
    $region7: #{_forward.1} parent=1 // loop_footer_branch
      %20 = sbr.rel target = $region3
    $region8: #{_forward.1} parent=1 // loop_exit
      _
    %544 = vsyncpa [#allocation3], 1
    %s545 = scalar_lea.sflag [#allocation3], 1
    %546 = vsyncpa %s545, 1
    %547 = vsyncpa [#allocation6], 1
    %548 = vsyncpa [#allocation9], 1
    %549 = vsyncpa [#allocation4], 1
    %s550 = scalar_lea.sflag [#allocation4], 1
    %551 = vsyncpa %s550, 1

// kernel: _forward.1
$region0: #{_forward.1}
  #allocation0 [shape = 'u32[]', space=smem, size = 0x4, offset = 0x4, fixed_abs, tag = 'smem constant byte address 0x4 - core index']
  #allocation1 [shape = 'u32[72,128]{1,0:T(1,128)}', space=vmem, size = 0x9000, scoped, tag = 'internal scratch']
  %s0 = inlined_call_operand.hbm [shape: f32[16,32], index: 0, kind: input, shape index: {}]
  %s1 = inlined_call_operand.hbm [shape: bf16[32,64], index: 1, kind: input, shape index: {}]
  %s2 = inlined_call_operand.vmem [shape: f32[1,64], index: 2, kind: input, shape index: {}]
  %s3 = inlined_call_operand.hbm [shape: bf16[64,64], index: 3, kind: input, shape index: {}]
  %s4 = inlined_call_operand.vmem [shape: f32[1,64], index: 4, kind: input, shape index: {}]
  %s5 = inlined_call_operand.vmem [shape: f32[1,32], index: 5, kind: input, shape index: {}]
  %s6 = inlined_call_operand.hbm [shape: f32[1,32], index: 6, kind: input, shape index: {}]
  %s7 = inlined_call_operand.hbm [shape: f32[16,32], index: 7, kind: output, shape index: {}]
  %s8 = sld [smem:[#allocation0]]
  $region77: #{_forward.1} parent=0
    _
  %s10 = ssub.s32 1, %s8
  %s11 = scalar_select 0, %s10, %s8
  $region1: #{_forward.1} parent=0
    #allocation2 [shape = 'u8[8192]{0}', space=vmem, size = 0x2000, scoped, tag = 'input window, operand 0']
    #allocation3 [shape = 's32[2]{0}', space=sflag, size = 0x8, scoped, tag = 'scoped memory for _forward.1']
    #allocation4 [shape = 's32[2]{0}', space=sflag, size = 0x8, scoped, tag = 'scoped memory for _forward.1']
    #allocation5 [shape = 'u8[8192]{0}', space=vmem, size = 0x2000, scoped, tag = 'input window, operand 1, single buffered']
    #allocation6 [shape = 's32[1]{0}', space=sflag, size = 0x4, scoped, tag = 'scoped memory for _forward.1']
    #allocation7 [shape = 'u8[16384]{0}', space=vmem, size = 0x4000, scoped, tag = 'input window, operand 3, single buffered']
    #allocation8 [shape = 'u8[512]{0}', space=vmem, size = 0x400, scoped, tag = 'input window, operand 6, single buffered']
    #allocation9 [shape = 's32[1]{0}', space=sflag, size = 0x4, scoped, tag = 'scoped memory for _forward.1']
    #allocation10 [shape = 'u8[8192]{0}', space=vmem, size = 0x2000, scoped, tag = 'output window, operand 0']
    %12 = vsyncpa [#allocation3], 0
    %s13 = scalar_lea.sflag [#allocation3], 1
    %14 = vsyncpa %s13, 0
    %15 = vsyncpa [#allocation6], 0
    %16 = vsyncpa [#allocation9], 0
    %17 = vsyncpa [#allocation4], 0
    %s18 = scalar_lea.sflag [#allocation4], 1
    %19 = vsyncpa %s18, 0
    loop: start=0, step=1, limit=4
    $region2: #{_forward.1} parent=1 // loop_pre_header
      _
    $region3: #{_forward.1} parent=1 // loop_header
      %s21 = sphi 0, %s25
      %p22 = scmp.ge.s32.totalorder %s21, 4
      %s31 = sphi 0, %s33
      %s34 = sphi 0, %s31
      %s35 = sphi 0, %s34
      %s51 = sphi 0, %s35
      %s55 = sphi 0, %s55
      %s57 = sphi 0, %s55
      %s58 = sphi 0, %s57
      %s72 = sphi 0, %s58
      %s76 = sphi 0, %s76
      %s78 = sphi 0, %s76
      %s79 = sphi 0, %s78
      %s93 = sphi 0, %s79
      %s97 = sphi 0, %s97
      %s99 = sphi 0, %s97
      %s100 = sphi 0, %s99
      %s114 = sphi 0, %s100
      %s118 = sphi 0, %s118
      %s120 = sphi 0, %s118
      %s121 = sphi 0, %s120
      %s135 = sphi 0, %s121
      %s139 = sphi 0, %s139
      %s141 = sphi 0, %s139
      %s142 = sphi 0, %s141
      %s156 = sphi 0, %s142
      %s160 = sphi 0, %s160
      %s162 = sphi 0, %s160
      %s163 = sphi 0, %s162
      %s177 = sphi 0, %s163
      %s183 = sphi 0, %s185
      %s186 = sphi 0, %s183
      %s187 = sphi 0, %s186
      %s203 = sphi 0, %s187
    $region4: #{_forward.1} parent=1 // loop_header_branch
      %24 = sbr.rel (%p22) target = $region8
    $region5: #{_forward.1} parent=1 // loop_body
      %s26 = ssub.s32 %s21, 1
      %s27 = ssub.s32 %s21, 2
      %s28 = sadd.s32 %s21, 1
      %s29 = ssub.s32 %s21, %s28
      %p30 = scmp.eq.s32.totalorder %s29, 0
      %s32 = sadd.s32 %s31, 1
      %s33 = scalar_select %p30, %s31, %s32
      %p36 = pneg %p30
      %p37 = scmp.eq.s32.totalorder %s21, 1
      %p38 = por %p36, %p37
      %p39 = scmp.ne.s32.totalorder %s31, %s34
      %p40 = scmp.eq.s32.totalorder %s21, 0
      %p41 = por %p39, %p40
      %p42 = scmp.ne.s32.totalorder %s31, %s34
      %p43 = scmp.eq.s32.totalorder %s26, 1
      %p44 = por %p42, %p43
      %p45 = scmp.ne.s32.totalorder %s34, %s35
      %p46 = scmp.eq.s32.totalorder %s26, 0
      %p47 = por %p45, %p46
      %p48 = scmp.ne.s32.totalorder %s34, %s35
      %p49 = scmp.eq.s32.totalorder %s27, 1
      %p50 = por %p48, %p49
      %p52 = scmp.ne.s32.totalorder %s35, %s51
      %p53 = scmp.eq.s32.totalorder %s27, 0
      %p54 = por %p52, %p53
      %s56 = sadd.s32 %s55, 1
      %p59 = scmp.eq.s32.totalorder %s21, 1
      %p60 = scmp.ne.s32.totalorder %s55, %s57
      %p61 = scmp.eq.s32.totalorder %s21, 0
      %p62 = por %p60, %p61
      %p63 = scmp.ne.s32.totalorder %s55, %s57
      %p64 = scmp.eq.s32.totalorder %s26, 1
      %p65 = por %p63, %p64
      %p66 = scmp.ne.s32.totalorder %s57, %s58
      %p67 = scmp.eq.s32.totalorder %s26, 0
      %p68 = por %p66, %p67
      %p69 = scmp.ne.s32.totalorder %s57, %s58
      %p70 = scmp.eq.s32.totalorder %s27, 1
      %p71 = por %p69, %p70
      %p73 = scmp.ne.s32.totalorder %s58, %s72
      %p74 = scmp.eq.s32.totalorder %s27, 0
      %p75 = por %p73, %p74
      %s77 = sadd.s32 %s76, 1
      %p80 = scmp.eq.s32.totalorder %s21, 1
      %p81 = scmp.ne.s32.totalorder %s76, %s78
      %p82 = scmp.eq.s32.totalorder %s21, 0
      %p83 = por %p81, %p82
      %p84 = scmp.ne.s32.totalorder %s76, %s78
      %p85 = scmp.eq.s32.totalorder %s26, 1
      %p86 = por %p84, %p85
      %p87 = scmp.ne.s32.totalorder %s78, %s79
      %p88 = scmp.eq.s32.totalorder %s26, 0
      %p89 = por %p87, %p88
      %p90 = scmp.ne.s32.totalorder %s78, %s79
      %p91 = scmp.eq.s32.totalorder %s27, 1
      %p92 = por %p90, %p91
      %p94 = scmp.ne.s32.totalorder %s79, %s93
      %p95 = scmp.eq.s32.totalorder %s27, 0
      %p96 = por %p94, %p95
      %s98 = sadd.s32 %s97, 1
      %p101 = scmp.eq.s32.totalorder %s21, 1
      %p102 = scmp.ne.s32.totalorder %s97, %s99
      %p103 = scmp.eq.s32.totalorder %s21, 0
      %p104 = por %p102, %p103
      %p105 = scmp.ne.s32.totalorder %s97, %s99
      %p106 = scmp.eq.s32.totalorder %s26, 1
      %p107 = por %p105, %p106
      %p108 = scmp.ne.s32.totalorder %s99, %s100
      %p109 = scmp.eq.s32.totalorder %s26, 0
      %p110 = por %p108, %p109
      %p111 = scmp.ne.s32.totalorder %s99, %s100
      %p112 = scmp.eq.s32.totalorder %s27, 1
      %p113 = por %p111, %p112
      %p115 = scmp.ne.s32.totalorder %s100, %s114
      %p116 = scmp.eq.s32.totalorder %s27, 0
      %p117 = por %p115, %p116
      %s119 = sadd.s32 %s118, 1
      %p122 = scmp.eq.s32.totalorder %s21, 1
      %p123 = scmp.ne.s32.totalorder %s118, %s120
      %p124 = scmp.eq.s32.totalorder %s21, 0
      %p125 = por %p123, %p124
      %p126 = scmp.ne.s32.totalorder %s118, %s120
      %p127 = scmp.eq.s32.totalorder %s26, 1
      %p128 = por %p126, %p127
      %p129 = scmp.ne.s32.totalorder %s120, %s121
      %p130 = scmp.eq.s32.totalorder %s26, 0
      %p131 = por %p129, %p130
      %p132 = scmp.ne.s32.totalorder %s120, %s121
      %p133 = scmp.eq.s32.totalorder %s27, 1
      %p134 = por %p132, %p133
      %p136 = scmp.ne.s32.totalorder %s121, %s135
      %p137 = scmp.eq.s32.totalorder %s27, 0
      %p138 = por %p136, %p137
      %s140 = sadd.s32 %s139, 1
      %p143 = scmp.eq.s32.totalorder %s21, 1
      %p144 = scmp.ne.s32.totalorder %s139, %s141
      %p145 = scmp.eq.s32.totalorder %s21, 0
      %p146 = por %p144, %p145
      %p147 = scmp.ne.s32.totalorder %s139, %s141
      %p148 = scmp.eq.s32.totalorder %s26, 1
      %p149 = por %p147, %p148
      %p150 = scmp.ne.s32.totalorder %s141, %s142
      %p151 = scmp.eq.s32.totalorder %s26, 0
      %p152 = por %p150, %p151
      %p153 = scmp.ne.s32.totalorder %s141, %s142
      %p154 = scmp.eq.s32.totalorder %s27, 1
      %p155 = por %p153, %p154
      %p157 = scmp.ne.s32.totalorder %s142, %s156
      %p158 = scmp.eq.s32.totalorder %s27, 0
      %p159 = por %p157, %p158
      %s161 = sadd.s32 %s160, 1
      %p164 = scmp.eq.s32.totalorder %s21, 1
      %p165 = scmp.ne.s32.totalorder %s160, %s162
      %p166 = scmp.eq.s32.totalorder %s21, 0
      %p167 = por %p165, %p166
      %p168 = scmp.ne.s32.totalorder %s160, %s162
      %p169 = scmp.eq.s32.totalorder %s26, 1
      %p170 = por %p168, %p169
      %p171 = scmp.ne.s32.totalorder %s162, %s163
      %p172 = scmp.eq.s32.totalorder %s26, 0
      %p173 = por %p171, %p172
      %p174 = scmp.ne.s32.totalorder %s162, %s163
      %p175 = scmp.eq.s32.totalorder %s27, 1
      %p176 = por %p174, %p175
      %p178 = scmp.ne.s32.totalorder %s163, %s177
      %p179 = scmp.eq.s32.totalorder %s27, 0
      %p180 = por %p178, %p179
      %s181 = ssub.s32 %s21, %s28
      %p182 = scmp.eq.s32.totalorder %s181, 0
      %s184 = sadd.s32 %s183, 1
      %s185 = scalar_select %p182, %s183, %s184
      %p188 = pneg %p182
      %p189 = scmp.eq.s32.totalorder %s21, 1
      %p190 = por %p188, %p189
      %p191 = scmp.ne.s32.totalorder %s183, %s186
      %p192 = scmp.eq.s32.totalorder %s21, 0
      %p193 = por %p191, %p192
      %p194 = scmp.ne.s32.totalorder %s183, %s186
      %p195 = scmp.eq.s32.totalorder %s26, 1
      %p196 = por %p194, %p195
      %p197 = scmp.ne.s32.totalorder %s186, %s187
      %p198 = scmp.eq.s32.totalorder %s26, 0
      %p199 = por %p197, %p198
      %p200 = scmp.ne.s32.totalorder %s186, %s187
      %p201 = scmp.eq.s32.totalorder %s27, 1
      %p202 = por %p200, %p201
      %p204 = scmp.ne.s32.totalorder %s187, %s203
      %p205 = scmp.eq.s32.totalorder %s27, 0
      %p206 = por %p204, %p205
      %p207 = scmp.le.s32.totalorder 1, %s21
      %p208 = scmp.lt.s32.totalorder %s21, 3
      %p209 = pnand %p207, %p208
      %p210 = pneg %p209
      // Predicated region
      $region9: #{_forward.1} parent=5 // pred_check
        _
      $region10: #{_forward.1} parent=5 // pred_check_branch
        %212 = sbr.rel (%p209) target = $region12
      $region11: #{_forward.1} parent=5 // pred_region
        %s213 = ssub.s32 %s21, 1
        // Predicated region
        $region13: #{_forward.1} parent=11 // pred_check
          %p214 = pneg %p68
        $region14: #{_forward.1} parent=11 // pred_check_branch
          %216 = sbr.rel (%p214) target = $region16
        $region15: #{_forward.1} parent=11 // pred_region
          %218 = vsyncadd [#allocation6], 0
          %s219 = sshll.u32 %s1, 4
          %s220 = int_to_ptr.hbm [resolvable:$true] %s219
          %s221 = sshll.u32 [#allocation5], 4
          %s222 = int_to_ptr.vmem [resolvable:$true] %s221
          %227 = dma.hbm_to_vmem [thread:$0]  %s220, 256, %s222, [#allocation6], 64, 64, 4
        $region16: #{_forward.1} parent=11 // pred_fallthru
          _
        // Predicated region
        $region17: #{_forward.1} parent=11 // pred_check
          %p228 = pneg %p89
        $region18: #{_forward.1} parent=11 // pred_check_branch
          %230 = sbr.rel (%p228) target = $region20
        $region19: #{_forward.1} parent=11 // pred_region
          _
        $region20: #{_forward.1} parent=11 // pred_fallthru
          _
        // Predicated region
        $region21: #{_forward.1} parent=11 // pred_check
          %p231 = pneg %p110
        $region22: #{_forward.1} parent=11 // pred_check_branch
          %233 = sbr.rel (%p231) target = $region24
        $region23: #{_forward.1} parent=11 // pred_region
          %235 = vsyncadd [#allocation6], 0
          %s236 = sshll.u32 %s3, 4
          %s237 = int_to_ptr.hbm [resolvable:$true] %s236
          %s238 = sshll.u32 [#allocation7], 4
          %s239 = int_to_ptr.vmem [resolvable:$true] %s238
          %244 = dma.hbm_to_vmem [thread:$0]  %s237, 512, %s239, [#allocation6], 64, 64, 4
        $region24: #{_forward.1} parent=11 // pred_fallthru
          _
        // Predicated region
        $region25: #{_forward.1} parent=11 // pred_check
          %p245 = pneg %p131
        $region26: #{_forward.1} parent=11 // pred_check_branch
          %247 = sbr.rel (%p245) target = $region28
        $region27: #{_forward.1} parent=11 // pred_region
          _
        $region28: #{_forward.1} parent=11 // pred_fallthru
          _
        // Predicated region
        $region29: #{_forward.1} parent=11 // pred_check
          %p248 = pneg %p152
        $region30: #{_forward.1} parent=11 // pred_check_branch
          %250 = sbr.rel (%p248) target = $region32
        $region31: #{_forward.1} parent=11 // pred_region
          _
        $region32: #{_forward.1} parent=11 // pred_fallthru
          _
        // Predicated region
        $region33: #{_forward.1} parent=11 // pred_check
          %p251 = pneg %p173
        $region34: #{_forward.1} parent=11 // pred_check_branch
          %253 = sbr.rel (%p251) target = $region36
        $region35: #{_forward.1} parent=11 // pred_region
          %255 = vsyncadd [#allocation9], 0
          %s257 = sshll.u32 %s6, 4
          %s258 = int_to_ptr.hbm [resolvable:$true] %s257
          %s259 = sshll.u32 [#allocation8], 4
          %s260 = int_to_ptr.vmem [resolvable:$true] %s259
          %262 = dma.hbm_to_vmem [thread:$0]  %s258, 16, %s260, [#allocation9]
        $region36: #{_forward.1} parent=11 // pred_fallthru
          _
      $region12: #{_forward.1} parent=5 // pred_fallthru
        _
      %p263 = scmp.lt.s32.totalorder %s21, 2
      // Predicated region
      $region37: #{_forward.1} parent=5 // pred_check
        %p264 = pneg %p263
      $region38: #{_forward.1} parent=5 // pred_check_branch
        %266 = sbr.rel (%p264) target = $region40
      $region39: #{_forward.1} parent=5 // pred_region
        // Predicated region
        $region41: #{_forward.1} parent=39 // pred_check
          %p267 = pneg %p41
        $region42: #{_forward.1} parent=39 // pred_check_branch
          %269 = sbr.rel (%p267) target = $region44
        $region43: #{_forward.1} parent=39 // pred_region
          %s270 = sand.u32 %s31, 1
          %s271 = scalar_lea.sflag [#allocation3], %s270
          %s272 = sand.u32 %s31, 1
          %s273 = smul.addr %s272, 8
          %s274 = scalar_lea.vmem [#allocation2], %s273
          %276 = vsyncadd %s271, 0
          %s277 = smul.addr %s21, 8
          %s278 = scalar_lea.hbm %s0, %s277
          %s280 = sshll.u32 %s278, 4
          %s281 = int_to_ptr.hbm [resolvable:$true] %s280
          %s282 = sshll.u32 %s274, 4
          %s283 = int_to_ptr.vmem [resolvable:$true] %s282
          %285 = dma.hbm_to_vmem [thread:$0]  %s281, 128, %s283, %s271
        $region44: #{_forward.1} parent=39 // pred_fallthru
          _
      $region40: #{_forward.1} parent=5 // pred_fallthru
        _
      %p286 = scmp.le.s32.totalorder 1, %s21
      %p287 = scmp.lt.s32.totalorder %s21, 3
      %p288 = pnand %p286, %p287
      %p289 = pneg %p288
      // Predicated region
      $region45: #{_forward.1} parent=5 // pred_check
        _
      $region46: #{_forward.1} parent=5 // pred_check_branch
        %291 = sbr.rel (%p288) target = $region48
      $region47: #{_forward.1} parent=5 // pred_region
        %s292 = ssub.s32 %s21, 1
        %s293 = sand.u32 %s34, 1
        %s294 = scalar_lea.sflag [#allocation3], %s293
        %s295 = sand.u32 %s34, 1
        %s296 = smul.addr %s295, 8
        %s297 = scalar_lea.vmem [#allocation2], %s296
        // Predicated region
        $region49: #{_forward.1} parent=47 // pred_check
          %p298 = pneg %p47
        $region50: #{_forward.1} parent=47 // pred_check_branch
          %300 = sbr.rel (%p298) target = $region52
        $region51: #{_forward.1} parent=47 // pred_region
          %302 = dma.done %s294, 128
        $region52: #{_forward.1} parent=47 // pred_fallthru
          _
        // Predicated region
        $region53: #{_forward.1} parent=47 // pred_check
          %p303 = pneg %p68
        $region54: #{_forward.1} parent=47 // pred_check_branch
          %305 = sbr.rel (%p303) target = $region56
        $region55: #{_forward.1} parent=47 // pred_region
          %307 = dma.done [#allocation6], 256
        $region56: #{_forward.1} parent=47 // pred_fallthru
          _
        // Predicated region
        $region57: #{_forward.1} parent=47 // pred_check
          %p308 = pneg %p110
        $region58: #{_forward.1} parent=47 // pred_check_branch
          %310 = sbr.rel (%p308) target = $region60
        $region59: #{_forward.1} parent=47 // pred_region
          %312 = dma.done [#allocation6], 512
        $region60: #{_forward.1} parent=47 // pred_fallthru
          _
        // Predicated region
        $region61: #{_forward.1} parent=47 // pred_check
          %p313 = pneg %p173
        $region62: #{_forward.1} parent=47 // pred_check_branch
          %315 = sbr.rel (%p313) target = $region64
        $region63: #{_forward.1} parent=47 // pred_region
          %317 = dma.done [#allocation9], 16
        $region64: #{_forward.1} parent=47 // pred_fallthru
          _
        %s318 = sand.u32 %s34, 1
        %s319 = scalar_lea.sflag [#allocation3], %s318
        %s320 = sand.u32 %s34, 1
        %s321 = smul.addr %s320, 8
        %s322 = scalar_lea.vmem [#allocation2], %s321
        %p323 = pneg %p47
        %p324 = pneg %p44
        %p325 = pneg %p68
        %p326 = pneg %p65
        %p327 = pneg %p89
        %p328 = pneg %p86
        %p329 = pneg %p110
        %p330 = pneg %p107
        %p331 = pneg %p131
        %p332 = pneg %p128
        %p333 = pneg %p152
        %p334 = pneg %p149
        %p335 = pneg %p173
        %p336 = pneg %p170
        %p337 = pneg %p199
        %p338 = pneg %p196
        %s339 = sand.u32 %s186, 1
        %s340 = scalar_lea.sflag [#allocation4], %s339
        %s341 = sand.u32 %s186, 1
        %s342 = smul.addr %s341, 8
        %s343 = scalar_lea.vmem [#allocation10], %s342
        %v345 = vld [vmem:[%s297] sm:$0xff]
        %v346 = vpack.c.bf16 %v345, %v345
        %v347 = vld [vmem:[#allocation5] sm:$0xf]
        %v348 = vld [vmem:[#allocation5 + $0x4] sm:$0xf]
        %v349 = vld [vmem:[#allocation5 + $0x8] sm:$0xf]
        %v350 = vld [vmem:[#allocation5 + $0xc] sm:$0xf]
        %v351 = vld [vmem:[%s2] sm:$0x1]
        %v353 = vperm.slane %v351, 0
        %v359 = vunpack.c.l.b16 %v347
        %v360 = vunpack.c.l.b16 %v348
        %v361 = vunpack.c.l.b16 %v349
        %v362 = vunpack.c.l.b16 %v350
        %v363 = vpack.c.b16 %v360, %v359
        %v364 = vpack.c.b16 %v362, %v361
        %vm367 = vcmask 261120
        %v369 = vsel %vm367, %v346, 0
        %371 = vmatpush.bf16.msra.mxu0 0
        %372 = vmatpush.bf16.msra.mxu0 0
        %373 = vmatpush.bf16.msra.mxu0 0
        %374 = vmatpush.bf16.msra.mxu0 0
        %375 = vmatpush.bf16.msra.mxu0 0
        %376 = vmatpush.bf16.msra.mxu0 0
        %377 = vmatpush.bf16.msra.mxu0 %v364
        %378 = vmatpush.bf16.msra.mxu0 %v363
        %379 = vmatmul.bf16.gmra.mxu0 %v369
        %v380 = vpop.f32.mrf.mxu0
        %v381 = vadd.f32 %v353, %v380
        %v382 = vpop.f32.mrf.mxu0
        %383 = vdwg.mxu0
        %v384 = vmax.f32 %v381, 0.0
        %v385 = vpack.c.bf16 %v384, %v384
        %v386 = vld [vmem:[#allocation7] sm:$0xf]
        %v387 = vld [vmem:[#allocation7 + $0x4] sm:$0xf]
        %v388 = vld [vmem:[#allocation7 + $0x8] sm:$0xf]
        %v389 = vld [vmem:[#allocation7 + $0xc] sm:$0xf]
        %v390 = vld [vmem:[#allocation7 + $0x10] sm:$0xf]
        %v391 = vld [vmem:[#allocation7 + $0x14] sm:$0xf]
        %v392 = vld [vmem:[#allocation7 + $0x18] sm:$0xf]
        %v393 = vld [vmem:[#allocation7 + $0x1c] sm:$0xf]
        %v394 = vld [vmem:[%s4] sm:$0x1]
        %v396 = vperm.slane %v394, 0
        %v406 = vunpack.c.l.b16 %v386
        %v407 = vunpack.c.l.b16 %v387
        %v408 = vunpack.c.l.b16 %v388
        %v409 = vunpack.c.l.b16 %v389
        %v410 = vunpack.c.l.b16 %v390
        %v411 = vunpack.c.l.b16 %v391
        %v412 = vunpack.c.l.b16 %v392
        %v413 = vunpack.c.l.b16 %v393
        %v414 = vpack.c.b16 %v407, %v406
        %v415 = vpack.c.b16 %v409, %v408
        %v416 = vpack.c.b16 %v411, %v410
        %v417 = vpack.c.b16 %v413, %v412
        %vm422 = vcmask 523264
        %v424 = vsel %vm422, %v385, 0
        %426 = vmatpush.bf16.msra.mxu0 0
        %427 = vmatpush.bf16.msra.mxu0 0
        %428 = vmatpush.bf16.msra.mxu0 0
        %429 = vmatpush.bf16.msra.mxu0 0
        %430 = vmatpush.bf16.msra.mxu0 %v417
        %431 = vmatpush.bf16.msra.mxu0 %v416
        %432 = vmatpush.bf16.msra.mxu0 %v415
        %433 = vmatpush.bf16.msra.mxu0 %v414
        %434 = vmatmul.bf16.gmra.mxu0 %v424
        %v435 = vpop.f32.mrf.mxu0
        %v436 = vadd.f32 %v396, %v435
        %v437 = vpop.f32.mrf.mxu0
        %438 = vdwg.mxu0
        %v439 = vxor.u32 %v436, 2147483648
        %v440 = vmul.f32 %v439, 1.442695
        %v441 = vpow.pop %v440
        %v442 = vadd.f32 %v441, 1.0
        %v443 = vrcp.pop %v442
        %v444 = vmul.f32 %v442, %v443
        %v445 = vsub.f32 1.0, %v444
        %v446 = vmul.f32 %v443, %v445
        %v447 = vadd.f32 %v443, %v446
        %vm448 = vweird.f32 %v442
        %vm449 = vweird.f32 %v443
        %vm450 = vmor %vm448, %vm449
        %v451 = vsel %vm450, %v443, %v447
        %v452 = vand.u32 2147483647, %v442
        %vm453 = vcmp.eq.f32.partialorder %v452, 8.507059e+37
        %v454 = vand.u32 %v442, 2147483648
        %v455 = vor.u32 1.1754944e-38, %v454
        %v456 = vsel %vm453, %v455, %v451
        %v457 = vmul.f32 1.0, %v456
        %459 = vrot.lane.b32.xlu0 %v457, 96
        %v460 = vpop.permute.xlu0 %459
        %v462 = vmul.f32 %v436, %v460
        %v463 = vsub.f32 1.0, %v457
        %465 = vrot.lane.b32.xlu0 %v463, 96
        %v466 = vpop.permute.xlu0 %465
        %v468 = vmul.f32 %v345, %v466
        %v469 = vadd.f32 %v462, %v468
        %v470 = vsel %vm367, %v469, 0.0
        %471 = vadd.xlane.f32.xlu0 %v470
        %v472 = vpop.xlane.xlu0 %471
        %v473 = vrcp.pop 32.0
        %v474 = vmul.f32 32.0, %v473
        %v475 = vsub.f32 1.0, %v474
        %v476 = vmul.f32 %v473, %v475
        %v477 = vadd.f32 %v473, %v476
        %vm478 = vweird.f32 %v473
        %v479 = vsel %vm478, %v473, %v477
        %v480 = vmul.f32 %v472, %v479
        %v481 = vsub.f32 %v469, %v480
        %v482 = vmul.f32 %v481, %v481
        %v483 = vsel %vm367, %v482, 0.0
        %484 = vadd.xlane.f32.xlu0 %v483
        %v485 = vpop.xlane.xlu0 %484
        %v486 = vmul.f32 %v485, %v479
        %v487 = vadd.f32 %v486, 1e-05
        %v488 = vrsqrt.pop %v487
        %v489 = vmul.f32 %v488, %v487
        %v490 = vmul.f32 %v489, %v488
        %v491 = vmul.f32 0.5, %v490
        %v492 = vsub.f32 1.5, %v491
        %v493 = vmul.f32 %v488, %v492
        %vm494 = vweird.f32 %v487
        %vm495 = vweird.f32 %v488
        %vm496 = vmor %vm494, %vm495
        %v497 = vsel %vm496, %v488, %v493
        %v498 = vmul.f32 %v481, %v497
        %v499 = vld [vmem:[%s5] sm:$0x1]
        %v501 = vperm.slane %v499, 0
        %v503 = vmul.f32 %v498, %v501
        %v504 = vld [vmem:[#allocation8] sm:$0x1]
        %v506 = vperm.slane %v504, 0
        %v508 = vadd.f32 %v503, %v506
        %509 = vst.msk [vmem:[%s343] sm:$0xff] %vm367, %v508
        %s510 = sand.u32 %s186, 1
        %s511 = scalar_lea.sflag [#allocation4], %s510
        %s512 = sand.u32 %s186, 1
        %s513 = smul.addr %s512, 8
        %s514 = scalar_lea.vmem [#allocation10], %s513
        // Predicated region
        $region65: #{_forward.1} parent=47 // pred_check
          %p515 = pneg %p196
        $region66: #{_forward.1} parent=47 // pred_check_branch
          %517 = sbr.rel (%p515) target = $region68
        $region67: #{_forward.1} parent=47 // pred_region
          %519 = vsyncadd %s511, 0
          %s520 = smul.addr %s26, 8
          %s521 = scalar_lea.hbm %s7, %s520
          %s523 = sshll.u32 %s514, 4
          %s524 = int_to_ptr.vmem [resolvable:$true] %s523
          %s525 = sshll.u32 %s521, 4
          %s526 = int_to_ptr.hbm [resolvable:$true] %s525
          %528 = dma.vmem_to_hbm [thread:$0]  %s524, 128, %s526, %s511
        $region68: #{_forward.1} parent=47 // pred_fallthru
          _
      $region48: #{_forward.1} parent=5 // pred_fallthru
        _
      %p529 = scmp.le.s32.totalorder 2, %s21
      // Predicated region
      $region69: #{_forward.1} parent=5 // pred_check
        %p530 = pneg %p529
      $region70: #{_forward.1} parent=5 // pred_check_branch
        %532 = sbr.rel (%p530) target = $region72
      $region71: #{_forward.1} parent=5 // pred_region
        %s533 = ssub.s32 %s21, 2
        // Predicated region
        $region73: #{_forward.1} parent=71 // pred_check
          %p534 = pneg %p202
        $region74: #{_forward.1} parent=71 // pred_check_branch
          %536 = sbr.rel (%p534) target = $region76
        $region75: #{_forward.1} parent=71 // pred_region
          %s537 = sand.u32 %s187, 1
          %s538 = scalar_lea.sflag [#allocation4], %s537
          %s539 = sand.u32 %s187, 1
          %s540 = smul.addr %s539, 8
          %s541 = scalar_lea.vmem [#allocation10], %s540
          %543 = dma.done %s538, 128
        $region76: #{_forward.1} parent=71 // pred_fallthru
          _
      $region72: #{_forward.1} parent=5 // pred_fallthru
        _
    $region6: #{_forward.1} parent=1 // loop_footer
      %s25 = sadd.s32 1, %s21
    $region7: #{_forward.1} parent=1 // loop_footer_branch
      %20 = sbr.rel target = $region3
    $region8: #{_forward.1} parent=1 // loop_exit
      _
    %544 = vsyncpa [#allocation3], 1
    %s545 = scalar_lea.sflag [#allocation3], 1
    %546 = vsyncpa %s545, 1
    %547 = vsyncpa [#allocation6], 1
    %548 = vsyncpa [#allocation9], 1
    %549 = vsyncpa [#allocation4], 1
    %s550 = scalar_lea.sflag [#allocation4], 1
    %551 = vsyncpa %s550, 1

</llo_original>
